<compile_context>
chip_gen: v5e
topology: v5e:2x2
jax: 0.10.0
libtpu: 0.0.40
codegen_flags: <defaults>
</compile_context>

<pallas_src>
import jax
import jax.numpy as jnp
from jax import lax
from jax.experimental import pallas as pl
from jax.experimental.pallas import tpu as pltpu

IN_DIM = 23
HID_DIM = 15
OUT_DIM = 2
LANE = 128  # TPU lane width


def _round_up(n, m):
    return ((n + m - 1) // m) * m


def mlp_kernel(x_ref, w1_ref, b1_ref, w2_ref, b2_ref, oT_ref):
    # x:  (tile_b, IN_DIM)   native layout, no wrapper transpose
    # w1: (HID_DIM, IN_DIM)  b1: (HID_DIM, 1)
    # Contract IN_DIM of w1 (axis 1) with IN_DIM of x (axis 1) -> (HID_DIM, tile_b),
    # i.e. the transpose is folded into the MXU contraction; result is lane-dense.
    h = lax.dot_general(
        w1_ref[...], x_ref[...],
        dimension_numbers=(((1,), (1,)), ((), ())),
        preferred_element_type=jnp.float32,
    )
    h = jnp.maximum(h + b1_ref[...], 0.0)
    # w2: (OUT_DIM, HID_DIM)  b2: (OUT_DIM, 1)  -> (OUT_DIM, tile_b)
    y = jnp.dot(w2_ref[...], h, preferred_element_type=jnp.float32)
    oT_ref[...] = (y + b2_ref[...]).astype(oT_ref.dtype)


def mlp_forward(x, w1, b1, w2, b2, *, tile_b=16384):
    """x: (B, 23).  Weights in PyTorch layout: w1 (15, 23), b1 (15,), w2 (2, 15), b2 (2,)."""
    B = x.shape[0]
    if B <= tile_b:
        # Single full-extent block: no divisibility constraint on B at all.
        tile_b = B
    else:
        # Multi-step grid: keep the tile lane-aligned; last block may be ragged
        # (Pallas masks the over-hanging reads/writes).
        tile_b = _round_up(tile_b, LANE)
    grid = (pl.cdiv(B, tile_b),)

    b1c = b1.reshape(HID_DIM, 1).astype(jnp.float32)
    b2c = b2.reshape(OUT_DIM, 1).astype(jnp.float32)

    outT = pl.pallas_call(
        mlp_kernel,
        out_shape=jax.ShapeDtypeStruct((OUT_DIM, B), x.dtype),
        grid=grid,
        in_specs=[
            # x tile: native (batch, feature) layout, full feature extent.
            pl.BlockSpec((tile_b, IN_DIM), lambda i: (i, 0)),
            # Weights / biases: constant index_map -> VMEM-resident across the grid.
            pl.BlockSpec((HID_DIM, IN_DIM), lambda i: (0, 0)),
            pl.BlockSpec((HID_DIM, 1), lambda i: (0, 0)),
            pl.BlockSpec((OUT_DIM, HID_DIM), lambda i: (0, 0)),
            pl.BlockSpec((OUT_DIM, 1), lambda i: (0, 0)),
        ],
        # Lane-dense output: batch on the 128-wide lane axis.
        out_specs=pl.BlockSpec((OUT_DIM, tile_b), lambda i: (0, i)),
        compiler_params=pltpu.CompilerParams(
            dimension_semantics=("parallel",),
            vmem_limit_bytes=32 * 1024 * 1024,
        ),
    )(x, w1, b1c, w2, b2c)

    # Tiny layout fix-up on the (2, B) result only.
    return outT.T


def init_params(key):
    """nn.Linear-style init (uniform +/- 1/sqrt(fan_in)), PyTorch (out, in) weight layout."""
    k1, k2, k3, k4 = jax.random.split(key, 4)
    bound1 = 1.0 / (IN_DIM ** 0.5)
    bound2 = 1.0 / (HID_DIM ** 0.5)
    w1 = jax.random.uniform(k1, (HID_DIM, IN_DIM), jnp.float32, -bound1, bound1)
    b1 = jax.random.uniform(k2, (HID_DIM,), jnp.float32, -bound1, bound1)
    w2 = jax.random.uniform(k3, (OUT_DIM, HID_DIM), jnp.float32, -bound2, bound2)
    b2 = jax.random.uniform(k4, (OUT_DIM,), jnp.float32, -bound2, bound2)
    return w1, b1, w2, b2


def reference_forward(x, w1, b1, w2, b2):
    h = jnp.maximum(x @ w1.T + b1, 0.0)
    return h @ w2.T + b2


if __name__ == "__main__":
    key = jax.random.PRNGKey(0)
    k_x, k_p = jax.random.split(key)
    w1, b1, w2, b2 = init_params(k_p)

    # Small shape consistent with the module: batch=8, in_features=23.
    B = 8
    x = jax.random.normal(k_x, (B, IN_DIM), jnp.float32)
    out = jax.block_until_ready(mlp_forward(x, w1, b1, w2, b2))
    ref = reference_forward(x, w1, b1, w2, b2)
    assert out.shape == (B, OUT_DIM)
    assert jnp.allclose(out, ref, atol=1e-4, rtol=1e-4), "mismatch vs reference (single block)"

    # Exercise the multi-step grid + ragged last block path (grid=3, last block 44 rows).
    B2 = 300
    x2 = jax.random.normal(k_x, (B2, IN_DIM), jnp.float32)
    out2 = jax.block_until_ready(mlp_forward(x2, w1, b1, w2, b2, tile_b=128))
    ref2 = reference_forward(x2, w1, b1, w2, b2)
    assert out2.shape == (B2, OUT_DIM)
    assert jnp.allclose(out2, ref2, atol=1e-4, rtol=1e-4), "mismatch vs reference (ragged grid)"

    print("KERNEL_OK")
</pallas_src>

<mosaic_0001>
module attributes {stable_mosaic.version = 11 : i64} {
  func.func @mlp_kernel(%arg0: i32, %arg1: memref<8x23xf32, #tpu.memory_space<vmem>>, %arg2: memref<15x23xf32, #tpu.memory_space<vmem>>, %arg3: memref<15x1xf32, #tpu.memory_space<vmem>>, %arg4: memref<2x15xf32, #tpu.memory_space<vmem>>, %arg5: memref<2x1xf32, #tpu.memory_space<vmem>>, %arg6: memref<2x8xf32, #tpu.memory_space<vmem>>) attributes {dimension_semantics = [#tpu.dimension_semantics<parallel>], iteration_bounds = array<i64: 1>, scalar_prefetch = 0 : i64, scratch_operands = 0 : i64, tpu.core_type = #tpu.core_type<tc>, window_params = [{transform_indices = @transform_0, window_bounds = array<i64: 8, 23>}, {pipeline_mode = #tpu.pipeline_mode<synchronous>, transform_indices = @transform_1, window_bounds = array<i64: 15, 23>}, {pipeline_mode = #tpu.pipeline_mode<synchronous>, transform_indices = @transform_2, window_bounds = array<i64: 15, 1>}, {pipeline_mode = #tpu.pipeline_mode<synchronous>, transform_indices = @transform_3, window_bounds = array<i64: 2, 15>}, {pipeline_mode = #tpu.pipeline_mode<synchronous>, transform_indices = @transform_4, window_bounds = array<i64: 2, 1>}, {transform_indices = @transform_5, window_bounds = array<i64: 2, 8>}]} {
    %c0 = arith.constant 0 : index
    %c0_0 = arith.constant 0 : index
    %0 = vector.load %arg2[%c0, %c0_0] : memref<15x23xf32, #tpu.memory_space<vmem>>, vector<15x23xf32>
    %c0_1 = arith.constant 0 : index
    %c0_2 = arith.constant 0 : index
    %1 = vector.load %arg1[%c0_1, %c0_2] : memref<8x23xf32, #tpu.memory_space<vmem>>, vector<8x23xf32>
    %cst = arith.constant dense<0.000000e+00> : vector<15x8xf32>
    %2 = tpu.matmul %0, %1, %cst {dimension_numbers = #tpu.dot_dimension_numbers<[1], [1], [0], [0], [0, 0, 1, 0], [], []>} : vector<15x23xf32>, vector<8x23xf32>, vector<15x8xf32> -> vector<15x8xf32>
    %c0_3 = arith.constant 0 : index
    %c0_4 = arith.constant 0 : index
    %3 = vector.load %arg3[%c0_3, %c0_4] : memref<15x1xf32, #tpu.memory_space<vmem>>, vector<15x1xf32>
    %4 = vector.broadcast %3 : vector<15x1xf32> to vector<15x8xf32>
    %5 = arith.addf %2, %4 : vector<15x8xf32>
    %cst_5 = arith.constant 0.000000e+00 : f32
    %6 = vector.broadcast %cst_5 : f32 to vector<15x8xf32>
    %7 = arith.maximumf %5, %6 : vector<15x8xf32>
    %c0_6 = arith.constant 0 : index
    %c0_7 = arith.constant 0 : index
    %8 = vector.load %arg4[%c0_6, %c0_7] : memref<2x15xf32, #tpu.memory_space<vmem>>, vector<2x15xf32>
    %cst_8 = arith.constant dense<0.000000e+00> : vector<2x8xf32>
    %9 = tpu.matmul %8, %7, %cst_8 {dimension_numbers = #tpu.dot_dimension_numbers<[1], [0], [0], [1], [0, 0, 1, 1], [], []>} : vector<2x15xf32>, vector<15x8xf32>, vector<2x8xf32> -> vector<2x8xf32>
    %c0_9 = arith.constant 0 : index
    %c0_10 = arith.constant 0 : index
    %10 = vector.load %arg5[%c0_9, %c0_10] : memref<2x1xf32, #tpu.memory_space<vmem>>, vector<2x1xf32>
    %11 = vector.broadcast %10 : vector<2x1xf32> to vector<2x8xf32>
    %12 = arith.addf %9, %11 : vector<2x8xf32>
    %c0_11 = arith.constant 0 : index
    %c0_12 = arith.constant 0 : index
    %13 = vector.load %arg6[%c0_11, %c0_12] : memref<2x8xf32, #tpu.memory_space<vmem>>, vector<2x8xf32>
    tpu.vector_store %arg6[%c0_11, %c0_12], %12 {strides = array<i32>} : memref<2x8xf32, #tpu.memory_space<vmem>>, vector<2x8xf32>,
    return
  }
  func.func @transform_0(%arg0: i32) -> (i32, i32) {
    %c0_i32 = arith.constant 0 : i32
    %c0_i32_0 = arith.constant 0 : i32
    return %arg0, %c0_i32 : i32, i32
  }
  func.func @transform_1(%arg0: i32) -> (i32, i32) {
    %c0_i32 = arith.constant 0 : i32
    %c0_i32_0 = arith.constant 0 : i32
    %c0_i32_1 = arith.constant 0 : i32
    return %c0_i32, %c0_i32_0 : i32, i32
  }
  func.func @transform_2(%arg0: i32) -> (i32, i32) {
    %c0_i32 = arith.constant 0 : i32
    %c0_i32_0 = arith.constant 0 : i32
    %c0_i32_1 = arith.constant 0 : i32
    return %c0_i32, %c0_i32_0 : i32, i32
  }
  func.func @transform_3(%arg0: i32) -> (i32, i32) {
    %c0_i32 = arith.constant 0 : i32
    %c0_i32_0 = arith.constant 0 : i32
    %c0_i32_1 = arith.constant 0 : i32
    return %c0_i32, %c0_i32_0 : i32, i32
  }
  func.func @transform_4(%arg0: i32) -> (i32, i32) {
    %c0_i32 = arith.constant 0 : i32
    %c0_i32_0 = arith.constant 0 : i32
    %c0_i32_1 = arith.constant 0 : i32
    return %c0_i32, %c0_i32_0 : i32, i32
  }
  func.func @transform_5(%arg0: i32) -> (i32, i32) {
    %c0_i32 = arith.constant 0 : i32
    %c0_i32_0 = arith.constant 0 : i32
    return %c0_i32, %arg0 : i32, i32
  }
}

</mosaic_0001>

<llo_original>
// kernel: tpu_custom_call.1
$region0: #{tpu_custom_call.1}
  #allocation0 [shape = 'u32[]', space=smem, size = 0x4, offset = 0x4, fixed_abs, tag = 'smem constant byte address 0x4 - core index']
  #allocation1 [shape = 'u32[72,128]{1,0:T(1,128)}', space=vmem, size = 0x9000, scoped, tag = 'internal scratch']
  %s0 = inlined_call_operand.hbm [shape: f32[8,23], index: 0, kind: input, shape index: {}]
  %s1 = inlined_call_operand.vmem [shape: f32[15,23], index: 1, kind: input, shape index: {}]
  %s2 = inlined_call_operand.vmem [shape: f32[15,1], index: 2, kind: input, shape index: {}]
  %s3 = inlined_call_operand.vmem [shape: f32[2,15], index: 3, kind: input, shape index: {}]
  %s4 = inlined_call_operand.vmem [shape: f32[2,1], index: 4, kind: input, shape index: {}]
  %s5 = inlined_call_operand.hbm [shape: f32[2,8], index: 5, kind: output, shape index: {}]
  %s6 = sld [smem:[#allocation0]]
  $region34: #{tpu_custom_call.1} parent=0
    _
  %s8 = ssub.s32 1, %s6
  %s9 = scalar_select 0, %s8, %s6
  $region1: #{tpu_custom_call.1} parent=0
    #allocation2 [shape = 'u8[4096]{0}', space=vmem, size = 0x1000, scoped, tag = 'input window, operand 0, single buffered']
    #allocation3 [shape = 's32[1]{0}', space=sflag, size = 0x4, scoped, tag = 'scoped memory for tpu_custom_call.1']
    #allocation4 [shape = 's32[1]{0}', space=sflag, size = 0x4, scoped, tag = 'scoped memory for tpu_custom_call.1']
    #allocation5 [shape = 'u8[1024]{0}', space=vmem, size = 0x400, scoped, tag = 'output window, operand 0, single buffered']
    %10 = vsyncpa [#allocation3], 0
    %11 = vsyncpa [#allocation4], 0
    // Predicated region
    $region2: #{tpu_custom_call.1} parent=1 // pred_check
      _
    $region3: #{tpu_custom_call.1} parent=1 // pred_check_branch
      %13 = sbr.rel (0) target = $region5
    $region4: #{tpu_custom_call.1} parent=1 // pred_region
      %15 = vsyncadd [#allocation3], 0
      %s17 = sshll.u32 %s0, 4
      %s18 = int_to_ptr.hbm [resolvable:$true] %s17
      %s19 = sshll.u32 [#allocation2], 4
      %s20 = int_to_ptr.vmem [resolvable:$true] %s19
      %22 = dma.hbm_to_vmem [thread:$0]  %s18, 128, %s20, [#allocation3]
    $region5: #{tpu_custom_call.1} parent=1 // pred_fallthru
      _
    // Predicated region
    $region6: #{tpu_custom_call.1} parent=1 // pred_check
      _
    $region7: #{tpu_custom_call.1} parent=1 // pred_check_branch
      %24 = sbr.rel (0) target = $region9
    $region8: #{tpu_custom_call.1} parent=1 // pred_region
      _
    $region9: #{tpu_custom_call.1} parent=1 // pred_fallthru
      _
    // Predicated region
    $region10: #{tpu_custom_call.1} parent=1 // pred_check
      _
    $region11: #{tpu_custom_call.1} parent=1 // pred_check_branch
      %26 = sbr.rel (0) target = $region13
    $region12: #{tpu_custom_call.1} parent=1 // pred_region
      _
    $region13: #{tpu_custom_call.1} parent=1 // pred_fallthru
      _
    // Predicated region
    $region14: #{tpu_custom_call.1} parent=1 // pred_check
      _
    $region15: #{tpu_custom_call.1} parent=1 // pred_check_branch
      %28 = sbr.rel (0) target = $region17
    $region16: #{tpu_custom_call.1} parent=1 // pred_region
      _
    $region17: #{tpu_custom_call.1} parent=1 // pred_fallthru
      _
    // Predicated region
    $region18: #{tpu_custom_call.1} parent=1 // pred_check
      _
    $region19: #{tpu_custom_call.1} parent=1 // pred_check_branch
      %30 = sbr.rel (0) target = $region21
    $region20: #{tpu_custom_call.1} parent=1 // pred_region
      _
    $region21: #{tpu_custom_call.1} parent=1 // pred_fallthru
      _
    // Predicated region
    $region22: #{tpu_custom_call.1} parent=1 // pred_check
      _
    $region23: #{tpu_custom_call.1} parent=1 // pred_check_branch
      %32 = sbr.rel (0) target = $region25
    $region24: #{tpu_custom_call.1} parent=1 // pred_region
      %34 = dma.done [#allocation3], 128
    $region25: #{tpu_custom_call.1} parent=1 // pred_fallthru
      _
    %v35 = vld [vmem:[%s1] sm:$0xff]
    %v36 = vld [vmem:[%s1 + $0x8] sm:$0x7f]
    %v37 = vld [vmem:[#allocation2] sm:$0xff]
    %v38 = vld [vmem:[%s2] sm:$0xff]
    %v39 = vld [vmem:[%s2 + $0x8] sm:$0x7f]
    %41 = vset.pattern.permute.xlu0 0
    %42 = vperm.xlu0 %41, %v38
    %v43 = vpop.permute.xlu0 %42
    %46 = vset.pattern.permute.xlu0 0
    %47 = vperm.xlu0 %46, %v39
    %v48 = vpop.permute.xlu0 %47
    %vm50 = vcmask 187392
    %v52 = vsel %vm50, %v35, 0
    %v55 = vsel %vm50, %v36, 0
    %v58 = vsel %vm50, %v37, 0
    %60 = vmatpush.xpose.msra.mxu0 0.0
    %61 = vmatpush.xpose.msra.mxu0 0.0
    %62 = vmatpush.xpose.msra.mxu0 0.0
    %63 = vmatpush.xpose.msra.mxu0 0.0
    %64 = vmatpush.xpose.msra.mxu0 0.0
    %65 = vmatpush.xpose.msra.mxu0 0.0
    %66 = vmatpush.xpose.msra.mxu0 0.0
    %67 = vmatpush.xpose.msra.mxu0 0.0
    %68 = vmatpush.xpose.msra.mxu0 0.0
    %69 = vmatpush.xpose.msra.mxu0 0.0
    %70 = vmatpush.xpose.msra.mxu0 0.0
    %71 = vmatpush.xpose.msra.mxu0 0.0
    %72 = vmatpush.xpose.msra.mxu0 0.0
    %73 = vmatpush.xpose.msra.mxu0 0.0
    %74 = vmatpush.xpose.msra.mxu0 0.0
    %75 = vmatpush.xpose.msra.mxu0 %v58
    %76 = vmatmul.f32.gmra.mxu0 %v52
    %v77 = vpop.f32.mrf.mxu0
    %v78 = vadd.f32 %v43, %v77
    %79 = vmatmul.f32.gmra.mxu0 %v55
    %v80 = vpop.f32.mrf.mxu0
    %v81 = vadd.f32 %v48, %v80
    %82 = vdwg.mxu0
    %v83 = vmax.f32 %v78, 0.0
    %v84 = vmax.f32 %v81, 0.0
    %v85 = vld [vmem:[%s3] sm:$0x3]
    %v86 = vld [vmem:[%s4] sm:$0x3]
    %88 = vset.pattern.permute.xlu0 0
    %89 = vperm.xlu0 %88, %v86
    %v90 = vpop.permute.xlu0 %89
    %vm92 = vcmask 121856
    %v94 = vsel %vm92, %v85, 0
    %vm96 = vcmask 1046528
    %v98 = vsel %vm96, %v84, 0
    %100 = vmatpush.msra.mxu0 0.0
    %101 = vmatpush.msra.mxu0 0.0
    %102 = vmatpush.msra.mxu0 0.0
    %103 = vmatpush.msra.mxu0 0.0
    %104 = vmatpush.msra.mxu0 0.0
    %105 = vmatpush.msra.mxu0 0.0
    %106 = vmatpush.msra.mxu0 0.0
    %107 = vmatpush.msra.mxu0 0.0
    %108 = vmatpush.msra.mxu0 0.0
    %109 = vmatpush.msra.mxu0 0.0
    %110 = vmatpush.msra.mxu0 0.0
    %111 = vmatpush.msra.mxu0 0.0
    %112 = vmatpush.msra.mxu0 0.0
    %113 = vmatpush.msra.mxu0 0.0
    %114 = vmatpush.msra.mxu0 %v98
    %115 = vmatpush.msra.mxu0 %v83
    %116 = vmatmul.f32.gmra.mxu0 %v94
    %v117 = vpop.f32.mrf.mxu0
    %v118 = vadd.f32 %v90, %v117
    %119 = vdwg.mxu0
    %vm120 = vcmask 58368
    %121 = vst.msk [vmem:[#allocation5] sm:$0x3] %vm120, %v118
    // Predicated region
    $region26: #{tpu_custom_call.1} parent=1 // pred_check
      _
    $region27: #{tpu_custom_call.1} parent=1 // pred_check_branch
      %123 = sbr.rel (0) target = $region29
    $region28: #{tpu_custom_call.1} parent=1 // pred_region
      %125 = vsyncadd [#allocation4], 0
      %s127 = sshll.u32 [#allocation5], 4
      %s128 = int_to_ptr.vmem [resolvable:$true] %s127
      %s129 = sshll.u32 %s5, 4
      %s130 = int_to_ptr.hbm [resolvable:$true] %s129
      %132 = dma.vmem_to_hbm [thread:$0]  %s128, 32, %s130, [#allocation4]
    $region29: #{tpu_custom_call.1} parent=1 // pred_fallthru
      _
    // Predicated region
    $region30: #{tpu_custom_call.1} parent=1 // pred_check
      _
    $region31: #{tpu_custom_call.1} parent=1 // pred_check_branch
      %134 = sbr.rel (0) target = $region33
    $region32: #{tpu_custom_call.1} parent=1 // pred_region
      %136 = dma.done [#allocation4], 32
    $region33: #{tpu_custom_call.1} parent=1 // pred_fallthru
      _
    %137 = vsyncpa [#allocation3], 1
    %138 = vsyncpa [#allocation4], 1

</llo_original>
